<compile_context>
chip_gen: v7x
topology: tpu7x:2x2x1
jax: 0.10.0
libtpu: 0.0.40
codegen_flags: <defaults>
</compile_context>

<pallas_src>
import functools

import jax
import jax.numpy as jnp
from jax.experimental import pallas as pl
from jax.experimental.pallas import tpu as pltpu


def _round_up(x, m):
    return ((x + m - 1) // m) * m


def _mlp_kernel(x_ref, w1_ref, b1_ref, w2_ref, b2_ref, w3_ref, b3_ref, o_ref):
    """Fused 3-layer MLP: Linear -> ReLU -> Linear -> ReLU -> Linear(out=1).

    x_ref  : (TB, IN)        batch tile (f32 or bf16)
    w1_ref : (IN, H1), b1_ref: (1, H1)  (b1/b2 always f32)
    w2_ref : (H1, H2), b2_ref: (1, H2)
    w3_ref : (1, H2)  final layer weights as a lane row (VPU path, no MXU)
    b3_ref : (1, 1)   SMEM scalar
    o_ref  : (TB, 1)  narrow output block
    """
    x = x_ref[...]

    h1 = jnp.dot(x, w1_ref[...], preferred_element_type=jnp.float32) + b1_ref[...]
    h1 = jnp.maximum(h1, 0.0)

    h2 = jnp.dot(h1.astype(w2_ref.dtype), w2_ref[...],
                 preferred_element_type=jnp.float32) + b2_ref[...]
    h2 = jnp.maximum(h2, 0.0)

    # Final (H2 -> 1) layer off the MXU: elementwise multiply + lane reduce
    # (rides VPU/XLU slots). b3 comes straight off the scalar path.
    o_ref[...] = jnp.sum(h2 * w3_ref[...], axis=-1, keepdims=True) + b3_ref[0, 0]


@functools.partial(jax.jit, static_argnames=("block_batch", "use_bf16"))
def regression_forward(x, w1, b1, w2, b2, w3, b3, *, block_batch=1024,
                       use_bf16=False):
    batch, in_dim = x.shape
    h1_dim = w1.shape[1]
    h2_dim = w2.shape[1]
    out_dim = w3.shape[1]
    assert out_dim == 1, "kernel is specialized for the demo's OUTPUT_DIM == 1"
    # TODO(synk): for OUTPUT_DIM > 1 route the last layer back onto the MXU
    # with a lane-padded (H2, 128k) weight block instead of the VPU reduce.

    if use_bf16:
        # Halves the dominant HBM stream (x); accumulation stays f32 via
        # preferred_element_type inside the kernel.
        x = x.astype(jnp.bfloat16)
        w1 = w1.astype(jnp.bfloat16)
        w2 = w2.astype(jnp.bfloat16)

    # Batch tile: multiple of 8 sublanes, capped by block_batch.  No padding
    # of x -- Pallas masks the ragged last block (row-wise compute, so
    # OOB-read rows never contaminate valid rows).
    tb = min(_round_up(block_batch, 8), _round_up(batch, 8))
    # Keep >= 2 grid steps once the batch is big enough for the v7x 2-TC
    # megacore split to pay for itself.
    if batch >= 2048:
        tb = min(tb, _round_up(pl.cdiv(batch, 2), 8))
    grid = (pl.cdiv(batch, tb),)

    w3_row = w3.reshape(1, h2_dim)  # (H2, 1) -> (1, H2) lane row for VPU path

    out = pl.pallas_call(
        _mlp_kernel,
        out_shape=jax.ShapeDtypeStruct((batch, 1), jnp.float32),
        grid=grid,
        in_specs=[
            pl.BlockSpec((tb, in_dim), lambda i: (i, 0)),      # x: tiled on batch
            pl.BlockSpec((in_dim, h1_dim), lambda i: (0, 0)),  # W1: resident
            pl.BlockSpec((1, h1_dim), lambda i: (0, 0)),       # b1: resident
            pl.BlockSpec((h1_dim, h2_dim), lambda i: (0, 0)),  # W2: resident
            pl.BlockSpec((1, h2_dim), lambda i: (0, 0)),       # b2: resident
            pl.BlockSpec((1, h2_dim), lambda i: (0, 0)),       # W3 row: resident
            pl.BlockSpec(memory_space=pltpu.MemorySpace.SMEM), # b3: SMEM scalar
        ],
        out_specs=pl.BlockSpec((tb, 1), lambda i: (i, 0)),
        compiler_params=pltpu.CompilerParams(
            dimension_semantics=("parallel",),   # megacore sharding on v7x
        ),
    )(x, w1, b1, w2, b2, w3_row, b3)
    return out


def init_params(key, input_dim, h1, h2, output_dim):
    """Deterministic synthetic params (PyTorch-Linear-style uniform init)."""
    keys = jax.random.split(key, 6)

    def linear_init(kw, kb, fan_in, fan_out):
        bound = 1.0 / jnp.sqrt(jnp.float32(fan_in))
        # stored as (in, out) so the kernel computes x @ W + b
        w = jax.random.uniform(kw, (fan_in, fan_out), jnp.float32, -bound, bound)
        b = jax.random.uniform(kb, (1, fan_out), jnp.float32, -bound, bound)
        return w, b

    w1, b1 = linear_init(keys[0], keys[1], input_dim, h1)
    w2, b2 = linear_init(keys[2], keys[3], h1, h2)
    w3, b3 = linear_init(keys[4], keys[5], h2, output_dim)
    return w1, b1, w2, b2, w3, b3


def _reference(x, w1, b1, w2, b2, w3, b3):
    h = jnp.maximum(x @ w1 + b1, 0.0)
    h = jnp.maximum(h @ w2 + b2, 0.0)
    return h @ w3 + b3


if __name__ == "__main__":
    INPUT_DIM, H1, H2, OUTPUT_DIM = 16, 32, 32, 1

    key = jax.random.PRNGKey(0)
    k_x, k_x2, k_p = jax.random.split(key, 3)
    params = init_params(k_p, INPUT_DIM, H1, H2, OUTPUT_DIM)

    # Case 1: single grid step (default large tile), batch a multiple of 8.
    x = jax.random.normal(k_x, (200, INPUT_DIM), jnp.float32)
    ref = _reference(x, *params)

    out = regression_forward(x, *params)
    jax.block_until_ready(out)
    assert out.shape == (200, OUTPUT_DIM), out.shape
    assert jnp.allclose(out, ref, atol=1e-4, rtol=1e-4)

    # Case 2: multi-step grid with a ragged (masked) last block.
    out2 = regression_forward(x, *params, block_batch=128)
    jax.block_until_ready(out2)
    assert jnp.allclose(out2, ref, atol=1e-4, rtol=1e-4)

    # Case 3: batch not a multiple of 8 -> ragged, unaligned last block.
    x3 = jax.random.normal(k_x2, (57, INPUT_DIM), jnp.float32)
    ref3 = _reference(x3, *params)
    out3 = regression_forward(x3, *params, block_batch=16)
    jax.block_until_ready(out3)
    assert out3.shape == (57, OUTPUT_DIM), out3.shape
    assert jnp.allclose(out3, ref3, atol=1e-4, rtol=1e-4)

    # Case 4: bf16 input/weight path (f32 accumulation) -- loose tolerance.
    out4 = regression_forward(x, *params, block_batch=128, use_bf16=True)
    jax.block_until_ready(out4)
    assert jnp.allclose(out4, ref, atol=1e-1, rtol=1e-1)

    print("KERNEL_OK")
</pallas_src>

<mosaic_0001>
module attributes {stable_mosaic.version = 11 : i64} {
  func.func @_mlp_kernel(%arg0: i32, %arg1: memref<200x16xf32, #tpu.memory_space<vmem>>, %arg2: memref<16x32xf32, #tpu.memory_space<vmem>>, %arg3: memref<1x32xf32, #tpu.memory_space<vmem>>, %arg4: memref<32x32xf32, #tpu.memory_space<vmem>>, %arg5: memref<1x32xf32, #tpu.memory_space<vmem>>, %arg6: memref<1x32xf32, #tpu.memory_space<vmem>>, %arg7: memref<1x1xf32, #tpu.memory_space<smem>>, %arg8: memref<200x1xf32, #tpu.memory_space<vmem>>) attributes {dimension_semantics = [#tpu.dimension_semantics<parallel>], iteration_bounds = array<i64: 1>, scalar_prefetch = 0 : i64, scratch_operands = 0 : i64, tpu.core_type = #tpu.core_type<tc>, window_params = [{transform_indices = @transform_0, window_bounds = array<i64: 200, 16>}, {pipeline_mode = #tpu.pipeline_mode<synchronous>, transform_indices = @transform_1, window_bounds = array<i64: 16, 32>}, {pipeline_mode = #tpu.pipeline_mode<synchronous>, transform_indices = @transform_2, window_bounds = array<i64: 1, 32>}, {pipeline_mode = #tpu.pipeline_mode<synchronous>, transform_indices = @transform_3, window_bounds = array<i64: 32, 32>}, {pipeline_mode = #tpu.pipeline_mode<synchronous>, transform_indices = @transform_4, window_bounds = array<i64: 1, 32>}, {pipeline_mode = #tpu.pipeline_mode<synchronous>, transform_indices = @transform_5, window_bounds = array<i64: 1, 32>}, {transform_indices = @transform_6, window_bounds = array<i64: 1, 1>}, {transform_indices = @transform_7, window_bounds = array<i64: 200, 1>}]} {
    %c0 = arith.constant 0 : index
    %c0_0 = arith.constant 0 : index
    %0 = vector.load %arg1[%c0, %c0_0] : memref<200x16xf32, #tpu.memory_space<vmem>>, vector<200x16xf32>
    %c0_1 = arith.constant 0 : index
    %c0_2 = arith.constant 0 : index
    %1 = vector.load %arg2[%c0_1, %c0_2] : memref<16x32xf32, #tpu.memory_space<vmem>>, vector<16x32xf32>
    %cst = arith.constant dense<0.000000e+00> : vector<200x32xf32>
    %2 = tpu.matmul %0, %1, %cst {dimension_numbers = #tpu.dot_dimension_numbers<[1], [0], [0], [1], [0, 0, 1, 1], [], []>} : vector<200x16xf32>, vector<16x32xf32>, vector<200x32xf32> -> vector<200x32xf32>
    %c0_3 = arith.constant 0 : index
    %c0_4 = arith.constant 0 : index
    %3 = vector.load %arg3[%c0_3, %c0_4] : memref<1x32xf32, #tpu.memory_space<vmem>>, vector<1x32xf32>
    %4 = vector.broadcast %3 : vector<1x32xf32> to vector<200x32xf32>
    %5 = arith.addf %2, %4 : vector<200x32xf32>
    %cst_5 = arith.constant 0.000000e+00 : f32
    %6 = vector.broadcast %cst_5 : f32 to vector<200x32xf32>
    %7 = arith.maximumf %5, %6 : vector<200x32xf32>
    %c0_6 = arith.constant 0 : index
    %c0_7 = arith.constant 0 : index
    %8 = vector.load %arg4[%c0_6, %c0_7] : memref<32x32xf32, #tpu.memory_space<vmem>>, vector<32x32xf32>
    %cst_8 = arith.constant dense<0.000000e+00> : vector<200x32xf32>
    %9 = tpu.matmul %7, %8, %cst_8 {dimension_numbers = #tpu.dot_dimension_numbers<[1], [0], [0], [1], [0, 0, 1, 1], [], []>} : vector<200x32xf32>, vector<32x32xf32>, vector<200x32xf32> -> vector<200x32xf32>
    %c0_9 = arith.constant 0 : index
    %c0_10 = arith.constant 0 : index
    %10 = vector.load %arg5[%c0_9, %c0_10] : memref<1x32xf32, #tpu.memory_space<vmem>>, vector<1x32xf32>
    %11 = vector.broadcast %10 : vector<1x32xf32> to vector<200x32xf32>
    %12 = arith.addf %9, %11 : vector<200x32xf32>
    %cst_11 = arith.constant 0.000000e+00 : f32
    %13 = vector.broadcast %cst_11 : f32 to vector<200x32xf32>
    %14 = arith.maximumf %12, %13 : vector<200x32xf32>
    %c0_12 = arith.constant 0 : index
    %c0_13 = arith.constant 0 : index
    %15 = vector.load %arg6[%c0_12, %c0_13] : memref<1x32xf32, #tpu.memory_space<vmem>>, vector<1x32xf32>
    %16 = vector.broadcast %15 : vector<1x32xf32> to vector<200x32xf32>
    %17 = arith.mulf %14, %16 : vector<200x32xf32>
    %cst_14 = arith.constant dense<0.000000e+00> : vector<200xf32>
    %18 = vector.multi_reduction <add>, %17, %cst_14 [1] : vector<200x32xf32> to vector<200xf32>
    %19 = vector.shape_cast %18 : vector<200xf32> to vector<200x1xf32>
    %c0_15 = arith.constant 0 : index
    %c0_16 = arith.constant 0 : index
    %20 = memref.load %arg7[%c0_15, %c0_16] : memref<1x1xf32, #tpu.memory_space<smem>>
    %21 = vector.broadcast %20 : f32 to vector<200x1xf32>
    %22 = arith.addf %19, %21 : vector<200x1xf32>
    %c0_17 = arith.constant 0 : index
    %c0_18 = arith.constant 0 : index
    %23 = vector.load %arg8[%c0_17, %c0_18] : memref<200x1xf32, #tpu.memory_space<vmem>>, vector<200x1xf32>
    tpu.vector_store %arg8[%c0_17, %c0_18], %22 {strides = array<i32>} : memref<200x1xf32, #tpu.memory_space<vmem>>, vector<200x1xf32>,
    return
  }
  func.func @transform_0(%arg0: i32) -> (i32, i32) {
    %c0_i32 = arith.constant 0 : i32
    %c0_i32_0 = arith.constant 0 : i32
    return %arg0, %c0_i32 : i32, i32
  }
  func.func @transform_1(%arg0: i32) -> (i32, i32) {
    %c0_i32 = arith.constant 0 : i32
    %c0_i32_0 = arith.constant 0 : i32
    %c0_i32_1 = arith.constant 0 : i32
    return %c0_i32, %c0_i32_0 : i32, i32
  }
  func.func @transform_2(%arg0: i32) -> (i32, i32) {
    %c0_i32 = arith.constant 0 : i32
    %c0_i32_0 = arith.constant 0 : i32
    %c0_i32_1 = arith.constant 0 : i32
    return %c0_i32, %c0_i32_0 : i32, i32
  }
  func.func @transform_3(%arg0: i32) -> (i32, i32) {
    %c0_i32 = arith.constant 0 : i32
    %c0_i32_0 = arith.constant 0 : i32
    %c0_i32_1 = arith.constant 0 : i32
    return %c0_i32, %c0_i32_0 : i32, i32
  }
  func.func @transform_4(%arg0: i32) -> (i32, i32) {
    %c0_i32 = arith.constant 0 : i32
    %c0_i32_0 = arith.constant 0 : i32
    %c0_i32_1 = arith.constant 0 : i32
    return %c0_i32, %c0_i32_0 : i32, i32
  }
  func.func @transform_5(%arg0: i32) -> (i32, i32) {
    %c0_i32 = arith.constant 0 : i32
    %c0_i32_0 = arith.constant 0 : i32
    %c0_i32_1 = arith.constant 0 : i32
    return %c0_i32, %c0_i32_0 : i32, i32
  }
  func.func @transform_6(%arg0: i32) -> (i32, i32) {
    %c0_i32 = arith.constant 0 : i32
    %c0_i32_0 = arith.constant 0 : i32
    %c0_i32_1 = arith.constant 0 : i32
    return %c0_i32, %c0_i32_0 : i32, i32
  }
  func.func @transform_7(%arg0: i32) -> (i32, i32) {
    %c0_i32 = arith.constant 0 : i32
    %c0_i32_0 = arith.constant 0 : i32
    return %arg0, %c0_i32 : i32, i32
  }
}

</mosaic_0001>

<llo_original>
// kernel: regression_forward.1
$region0: #{regression_forward.1}
  #allocation0 [shape = 'u32[]', space=smem, size = 0x4, offset = 0x4, fixed_abs, tag = 'smem constant byte address 0x4 - core index']
  #allocation1 [shape = 'u32[144,128]{1,0:T(1,128)}', space=vmem, size = 0x12000, scoped, tag = 'internal scratch']
  #allocation2 [shape = 'f32[1,1]{1,0:T(1,128)S(6)}', space=smem, size = 0x200, scoped, tag = 'scoped memory for regression_forward.1']
  %s0 = inlined_call_operand.vmem [shape: f32[200,16], index: 0, kind: input, shape index: {}]
  %s1 = inlined_call_operand.vmem [shape: f32[16,32], index: 1, kind: input, shape index: {}]
  %s2 = inlined_call_operand.vmem [shape: f32[1,32], index: 2, kind: input, shape index: {}]
  %s3 = inlined_call_operand.vmem [shape: f32[32,32], index: 3, kind: input, shape index: {}]
  %s4 = inlined_call_operand.vmem [shape: f32[1,32], index: 4, kind: input, shape index: {}]
  %s5 = inlined_call_operand.vmem [shape: f32[1,32], index: 5, kind: input, shape index: {}]
  %s6 = inlined_call_operand.<no memory space> [shape: f32[1,1], index: 6, kind: input, shape index: {}]
  %s7 = inlined_call_operand.vmem [shape: f32[200,1], index: 7, kind: output, shape index: {}]
  %s8 = sld [smem:[#allocation0]]
  $region38: #{regression_forward.1} parent=0
    _
  %s10 = ssub.s32 1, %s8
  %s11 = scalar_select 0, %s10, %s8
  %12 = sst [smem:[#allocation2]] %s6
  // Predicated region
  $region2: #{regression_forward.1} parent=0 // pred_check
    _
  $region3: #{regression_forward.1} parent=0 // pred_check_branch
    %14 = sbr.rel (0) target = $region5
  $region4: #{regression_forward.1} parent=0 // pred_region
    _
  $region5: #{regression_forward.1} parent=0 // pred_fallthru
    _
  // Predicated region
  $region6: #{regression_forward.1} parent=0 // pred_check
    _
  $region7: #{regression_forward.1} parent=0 // pred_check_branch
    %16 = sbr.rel (0) target = $region9
  $region8: #{regression_forward.1} parent=0 // pred_region
    _
  $region9: #{regression_forward.1} parent=0 // pred_fallthru
    _
  // Predicated region
  $region10: #{regression_forward.1} parent=0 // pred_check
    _
  $region11: #{regression_forward.1} parent=0 // pred_check_branch
    %18 = sbr.rel (0) target = $region13
  $region12: #{regression_forward.1} parent=0 // pred_region
    _
  $region13: #{regression_forward.1} parent=0 // pred_fallthru
    _
  // Predicated region
  $region14: #{regression_forward.1} parent=0 // pred_check
    _
  $region15: #{regression_forward.1} parent=0 // pred_check_branch
    %20 = sbr.rel (0) target = $region17
  $region16: #{regression_forward.1} parent=0 // pred_region
    _
  $region17: #{regression_forward.1} parent=0 // pred_fallthru
    _
  // Predicated region
  $region18: #{regression_forward.1} parent=0 // pred_check
    _
  $region19: #{regression_forward.1} parent=0 // pred_check_branch
    %22 = sbr.rel (0) target = $region21
  $region20: #{regression_forward.1} parent=0 // pred_region
    _
  $region21: #{regression_forward.1} parent=0 // pred_fallthru
    _
  // Predicated region
  $region22: #{regression_forward.1} parent=0 // pred_check
    _
  $region23: #{regression_forward.1} parent=0 // pred_check_branch
    %24 = sbr.rel (0) target = $region25
  $region24: #{regression_forward.1} parent=0 // pred_region
    _
  $region25: #{regression_forward.1} parent=0 // pred_fallthru
    _
  // Predicated region
  $region26: #{regression_forward.1} parent=0 // pred_check
    _
  $region27: #{regression_forward.1} parent=0 // pred_check_branch
    %26 = sbr.rel (0) target = $region29
  $region28: #{regression_forward.1} parent=0 // pred_region
    _
  $region29: #{regression_forward.1} parent=0 // pred_fallthru
    _
  %v27 = vld [vmem:[%s0] sm:$0xff]
  %v28 = vld [vmem:[%s0 + $0x8] sm:$0xff]
  %v29 = vld [vmem:[%s0 + $0x10] sm:$0xff]
  %v30 = vld [vmem:[%s0 + $0x18] sm:$0xff]
  %v31 = vld [vmem:[%s0 + $0x20] sm:$0xff]
  %v32 = vld [vmem:[%s0 + $0x28] sm:$0xff]
  %v33 = vld [vmem:[%s0 + $0x30] sm:$0xff]
  %v34 = vld [vmem:[%s0 + $0x38] sm:$0xff]
  %v35 = vld [vmem:[%s0 + $0x40] sm:$0xff]
  %v36 = vld [vmem:[%s0 + $0x48] sm:$0xff]
  %v37 = vld [vmem:[%s0 + $0x50] sm:$0xff]
  %v38 = vld [vmem:[%s0 + $0x58] sm:$0xff]
  %v39 = vld [vmem:[%s0 + $0x60] sm:$0xff]
  %v40 = vld [vmem:[%s0 + $0x68] sm:$0xff]
  %v41 = vld [vmem:[%s0 + $0x70] sm:$0xff]
  %v42 = vld [vmem:[%s0 + $0x78] sm:$0xff]
  %v43 = vld [vmem:[%s0 + $0x80] sm:$0xff]
  %v44 = vld [vmem:[%s0 + $0x88] sm:$0xff]
  %v45 = vld [vmem:[%s0 + $0x90] sm:$0xff]
  %v46 = vld [vmem:[%s0 + $0x98] sm:$0xff]
  %v47 = vld [vmem:[%s0 + $0xa0] sm:$0xff]
  %v48 = vld [vmem:[%s0 + $0xa8] sm:$0xff]
  %v49 = vld [vmem:[%s0 + $0xb0] sm:$0xff]
  %v50 = vld [vmem:[%s0 + $0xb8] sm:$0xff]
  %v51 = vld [vmem:[%s0 + $0xc0] sm:$0xff]
  %v52 = vld [vmem:[%s1] sm:$0xff]
  %v53 = vld [vmem:[%s1 + $0x8] sm:$0xff]
  %v54 = vld [vmem:[%s2] sm:$0x1]
  %v56 = vlaneseq
  %v57 = vshrl.u32 %v56, 7
  %v58 = vsub.s32 0, %v57
  %v59 = vrot.slane %v54, %v58
  %vm61 = vcmask 130048
  %v63 = vsel %vm61, %v27, 0
  %v66 = vsel %vm61, %v28, 0
  %v69 = vsel %vm61, %v29, 0
  %v72 = vsel %vm61, %v30, 0
  %v75 = vsel %vm61, %v31, 0
  %v78 = vsel %vm61, %v32, 0
  %v81 = vsel %vm61, %v33, 0
  %v84 = vsel %vm61, %v34, 0
  %v87 = vsel %vm61, %v35, 0
  %v90 = vsel %vm61, %v36, 0
  %v93 = vsel %vm61, %v37, 0
  %v96 = vsel %vm61, %v38, 0
  %v99 = vsel %vm61, %v39, 0
  %v102 = vsel %vm61, %v40, 0
  %v105 = vsel %vm61, %v41, 0
  %v108 = vsel %vm61, %v42, 0
  %v111 = vsel %vm61, %v43, 0
  %v114 = vsel %vm61, %v44, 0
  %v117 = vsel %vm61, %v45, 0
  %v120 = vsel %vm61, %v46, 0
  %v123 = vsel %vm61, %v47, 0
  %v126 = vsel %vm61, %v48, 0
  %v129 = vsel %vm61, %v49, 0
  %v132 = vsel %vm61, %v50, 0
  %v135 = vsel %vm61, %v51, 0
  %137 = vmatprep.subr.mxu0 0.0
  %138 = vmatpush1.msra.mxu0 %v52
  %139 = vmatprep.subr.mxu0 0.0
  %140 = vmatpush1.msra.mxu0 %v53
  %141 = vmatprep.subr.mxu0 0.0
  %142 = vmatpush1.msra.mxu0 0.0
  %143 = vmatprep.subr.mxu0 0.0
  %144 = vmatpush1.msra.mxu0 0.0
  %145 = vmatprep.subr.mxu0 0.0
  %146 = vmatpush1.msra.mxu0 0.0
  %147 = vmatprep.subr.mxu0 0.0
  %148 = vmatpush1.msra.mxu0 0.0
  %149 = vmatprep.subr.mxu0 0.0
  %150 = vmatpush1.msra.mxu0 0.0
  %151 = vmatprep.subr.mxu0 0.0
  %152 = vmatpush1.msra.mxu0 0.0
  %153 = vmatprep.subr.mxu0 0.0
  %154 = vmatpush1.msra.mxu0 0.0
  %155 = vmatprep.subr.mxu0 0.0
  %156 = vmatpush1.msra.mxu0 0.0
  %157 = vmatprep.subr.mxu0 0.0
  %158 = vmatpush1.msra.mxu0 0.0
  %159 = vmatprep.subr.mxu0 0.0
  %160 = vmatpush1.msra.mxu0 0.0
  %161 = vmatprep.subr.mxu0 0.0
  %162 = vmatpush1.msra.mxu0 0.0
  %163 = vmatprep.subr.mxu0 0.0
  %164 = vmatpush1.msra.mxu0 0.0
  %165 = vmatprep.subr.mxu0 0.0
  %166 = vmatpush1.msra.mxu0 0.0
  %167 = vmatprep.subr.mxu0 0.0
  %168 = vmatpush1.msra.mxu0 0.0
  %169 = vmatprep.subr.mxu0 0.0
  %170 = vmatpush1.msra.mxu0 0.0
  %171 = vmatprep.subr.mxu0 0.0
  %172 = vmatpush1.msra.mxu0 0.0
  %173 = vmatprep.subr.mxu0 0.0
  %174 = vmatpush1.msra.mxu0 0.0
  %175 = vmatprep.subr.mxu0 0.0
  %176 = vmatpush1.msra.mxu0 0.0
  %177 = vmatprep.subr.mxu0 0.0
  %178 = vmatpush1.msra.mxu0 0.0
  %179 = vmatprep.subr.mxu0 0.0
  %180 = vmatpush1.msra.mxu0 0.0
  %181 = vmatprep.subr.mxu0 0.0
  %182 = vmatpush1.msra.mxu0 0.0
  %183 = vmatprep.subr.mxu0 0.0
  %184 = vmatpush1.msra.mxu0 0.0
  %185 = vmatprep.subr.mxu0 0.0
  %186 = vmatpush1.msra.mxu0 0.0
  %187 = vmatprep.subr.mxu0 0.0
  %188 = vmatpush1.msra.mxu0 0.0
  %189 = vmatprep.subr.mxu0 0.0
  %190 = vmatpush1.msra.mxu0 0.0
  %191 = vmatprep.subr.mxu0 0.0
  %192 = vmatpush1.msra.mxu0 0.0
  %193 = vmatprep.subr.mxu0 0.0
  %194 = vmatpush1.msra.mxu0 0.0
  %195 = vmatprep.subr.mxu0 0.0
  %196 = vmatpush1.msra.mxu0 0.0
  %197 = vmatprep.subr.mxu0 0.0
  %198 = vmatpush1.msra.mxu0 0.0
  %199 = vmatprep.subr.mxu0 0.0
  %200 = vmatpush1.msra.mxu0 0.0
  %201 = vmatprep.mubr.f32.mxu0 0.0
  %202 = vmatmul.mubr.f32.gmra.mrb[0].mxu0 %v63
  %v203 = vpop.f32.mrb[0].mxu0
  %v204 = vadd.f32 %v59, %v203
  %v205 = vpop.f32.mrb[0].mxu0
  %206 = vmatprep.mubr.f32.mxu0 0.0
  %207 = vmatmul.mubr.f32.gmra.mrb[0].mxu0 %v66
  %v208 = vpop.f32.mrb[0].mxu0
  %v209 = vadd.f32 %v59, %v208
  %v210 = vpop.f32.mrb[0].mxu0
  %211 = vmatprep.mubr.f32.mxu0 0.0
  %212 = vmatmul.mubr.f32.gmra.mrb[0].mxu0 %v69
  %v213 = vpop.f32.mrb[0].mxu0
  %v214 = vadd.f32 %v59, %v213
  %v215 = vpop.f32.mrb[0].mxu0
  %216 = vmatprep.mubr.f32.mxu0 0.0
  %217 = vmatmul.mubr.f32.gmra.mrb[0].mxu0 %v72
  %v218 = vpop.f32.mrb[0].mxu0
  %v219 = vadd.f32 %v59, %v218
  %v220 = vpop.f32.mrb[0].mxu0
  %221 = vmatprep.mubr.f32.mxu0 0.0
  %222 = vmatmul.mubr.f32.gmra.mrb[0].mxu0 %v75
  %v223 = vpop.f32.mrb[0].mxu0
  %v224 = vadd.f32 %v59, %v223
  %v225 = vpop.f32.mrb[0].mxu0
  %226 = vmatprep.mubr.f32.mxu0 0.0
  %227 = vmatmul.mubr.f32.gmra.mrb[0].mxu0 %v78
  %v228 = vpop.f32.mrb[0].mxu0
  %v229 = vadd.f32 %v59, %v228
  %v230 = vpop.f32.mrb[0].mxu0
  %231 = vmatprep.mubr.f32.mxu0 0.0
  %232 = vmatmul.mubr.f32.gmra.mrb[0].mxu0 %v81
  %v233 = vpop.f32.mrb[0].mxu0
  %v234 = vadd.f32 %v59, %v233
  %v235 = vpop.f32.mrb[0].mxu0
  %236 = vmatprep.mubr.f32.mxu0 0.0
  %237 = vmatmul.mubr.f32.gmra.mrb[0].mxu0 %v84
  %v238 = vpop.f32.mrb[0].mxu0
  %v239 = vadd.f32 %v59, %v238
  %v240 = vpop.f32.mrb[0].mxu0
  %241 = vmatprep.mubr.f32.mxu0 0.0
  %242 = vmatmul.mubr.f32.gmra.mrb[0].mxu0 %v87
  %v243 = vpop.f32.mrb[0].mxu0
  %v244 = vadd.f32 %v59, %v243
  %v245 = vpop.f32.mrb[0].mxu0
  %246 = vmatprep.mubr.f32.mxu0 0.0
  %247 = vmatmul.mubr.f32.gmra.mrb[0].mxu0 %v90
  %v248 = vpop.f32.mrb[0].mxu0
  %v249 = vadd.f32 %v59, %v248
  %v250 = vpop.f32.mrb[0].mxu0
  %251 = vmatprep.mubr.f32.mxu0 0.0
  %252 = vmatmul.mubr.f32.gmra.mrb[0].mxu0 %v93
  %v253 = vpop.f32.mrb[0].mxu0
  %v254 = vadd.f32 %v59, %v253
  %v255 = vpop.f32.mrb[0].mxu0
  %256 = vmatprep.mubr.f32.mxu0 0.0
  %257 = vmatmul.mubr.f32.gmra.mrb[0].mxu0 %v96
  %v258 = vpop.f32.mrb[0].mxu0
  %v259 = vadd.f32 %v59, %v258
  %v260 = vpop.f32.mrb[0].mxu0
  %261 = vmatprep.mubr.f32.mxu0 0.0
  %262 = vmatmul.mubr.f32.gmra.mrb[0].mxu0 %v99
  %v263 = vpop.f32.mrb[0].mxu0
  %v264 = vadd.f32 %v59, %v263
  %v265 = vpop.f32.mrb[0].mxu0
  %266 = vmatprep.mubr.f32.mxu0 0.0
  %267 = vmatmul.mubr.f32.gmra.mrb[0].mxu0 %v102
  %v268 = vpop.f32.mrb[0].mxu0
  %v269 = vadd.f32 %v59, %v268
  %v270 = vpop.f32.mrb[0].mxu0
  %271 = vmatprep.mubr.f32.mxu0 0.0
  %272 = vmatmul.mubr.f32.gmra.mrb[0].mxu0 %v105
  %v273 = vpop.f32.mrb[0].mxu0
  %v274 = vadd.f32 %v59, %v273
  %v275 = vpop.f32.mrb[0].mxu0
  %276 = vmatprep.mubr.f32.mxu0 0.0
  %277 = vmatmul.mubr.f32.gmra.mrb[0].mxu0 %v108
  %v278 = vpop.f32.mrb[0].mxu0
  %v279 = vadd.f32 %v59, %v278
  %v280 = vpop.f32.mrb[0].mxu0
  %281 = vmatprep.mubr.f32.mxu0 0.0
  %282 = vmatmul.mubr.f32.gmra.mrb[0].mxu0 %v111
  %v283 = vpop.f32.mrb[0].mxu0
  %v284 = vadd.f32 %v59, %v283
  %v285 = vpop.f32.mrb[0].mxu0
  %286 = vmatprep.mubr.f32.mxu0 0.0
  %287 = vmatmul.mubr.f32.gmra.mrb[0].mxu0 %v114
  %v288 = vpop.f32.mrb[0].mxu0
  %v289 = vadd.f32 %v59, %v288
  %v290 = vpop.f32.mrb[0].mxu0
  %291 = vmatprep.mubr.f32.mxu0 0.0
  %292 = vmatmul.mubr.f32.gmra.mrb[0].mxu0 %v117
  %v293 = vpop.f32.mrb[0].mxu0
  %v294 = vadd.f32 %v59, %v293
  %v295 = vpop.f32.mrb[0].mxu0
  %296 = vmatprep.mubr.f32.mxu0 0.0
  %297 = vmatmul.mubr.f32.gmra.mrb[0].mxu0 %v120
  %v298 = vpop.f32.mrb[0].mxu0
  %v299 = vadd.f32 %v59, %v298
  %v300 = vpop.f32.mrb[0].mxu0
  %301 = vmatprep.mubr.f32.mxu0 0.0
  %302 = vmatmul.mubr.f32.gmra.mrb[0].mxu0 %v123
  %v303 = vpop.f32.mrb[0].mxu0
  %v304 = vadd.f32 %v59, %v303
  %v305 = vpop.f32.mrb[0].mxu0
  %306 = vmatprep.mubr.f32.mxu0 0.0
  %307 = vmatmul.mubr.f32.gmra.mrb[0].mxu0 %v126
  %v308 = vpop.f32.mrb[0].mxu0
  %v309 = vadd.f32 %v59, %v308
  %v310 = vpop.f32.mrb[0].mxu0
  %311 = vmatprep.mubr.f32.mxu0 0.0
  %312 = vmatmul.mubr.f32.gmra.mrb[0].mxu0 %v129
  %v313 = vpop.f32.mrb[0].mxu0
  %v314 = vadd.f32 %v59, %v313
  %v315 = vpop.f32.mrb[0].mxu0
  %316 = vmatprep.mubr.f32.mxu0 0.0
  %317 = vmatmul.mubr.f32.gmra.mrb[0].mxu0 %v132
  %v318 = vpop.f32.mrb[0].mxu0
  %v319 = vadd.f32 %v59, %v318
  %v320 = vpop.f32.mrb[0].mxu0
  %321 = vmatprep.mubr.f32.mxu0 0.0
  %322 = vmatmul.mubr.f32.gmra.mrb[0].mxu0 %v135
  %v323 = vpop.f32.mrb[0].mxu0
  %v324 = vadd.f32 %v59, %v323
  %v325 = vpop.f32.mrb[0].mxu0
  %326 = vdwg.mxu0
  %v327 = vmax.f32 %v204, 0.0
  %v328 = vmax.f32 %v209, 0.0
  %v329 = vmax.f32 %v214, 0.0
  %v330 = vmax.f32 %v219, 0.0
  %v331 = vmax.f32 %v224, 0.0
  %v332 = vmax.f32 %v229, 0.0
  %v333 = vmax.f32 %v234, 0.0
  %v334 = vmax.f32 %v239, 0.0
  %v335 = vmax.f32 %v244, 0.0
  %v336 = vmax.f32 %v249, 0.0
  %v337 = vmax.f32 %v254, 0.0
  %v338 = vmax.f32 %v259, 0.0
  %v339 = vmax.f32 %v264, 0.0
  %v340 = vmax.f32 %v269, 0.0
  %v341 = vmax.f32 %v274, 0.0
  %v342 = vmax.f32 %v279, 0.0
  %v343 = vmax.f32 %v284, 0.0
  %v344 = vmax.f32 %v289, 0.0
  %v345 = vmax.f32 %v294, 0.0
  %v346 = vmax.f32 %v299, 0.0
  %v347 = vmax.f32 %v304, 0.0
  %v348 = vmax.f32 %v309, 0.0
  %v349 = vmax.f32 %v314, 0.0
  %v350 = vmax.f32 %v319, 0.0
  %v351 = vmax.f32 %v324, 0.0
  %v352 = vld [vmem:[%s3] sm:$0xff]
  %v353 = vld [vmem:[%s3 + $0x8] sm:$0xff]
  %v354 = vld [vmem:[%s3 + $0x10] sm:$0xff]
  %v355 = vld [vmem:[%s3 + $0x18] sm:$0xff]
  %v356 = vld [vmem:[%s4] sm:$0x1]
  %v358 = vlaneseq
  %v359 = vshrl.u32 %v358, 7
  %v360 = vsub.s32 0, %v359
  %v361 = vrot.slane %v356, %v360
  %vm363 = vcmask 261120
  %v365 = vsel %vm363, %v327, 0
  %v368 = vsel %vm363, %v328, 0
  %v371 = vsel %vm363, %v329, 0
  %v374 = vsel %vm363, %v330, 0
  %v377 = vsel %vm363, %v331, 0
  %v380 = vsel %vm363, %v332, 0
  %v383 = vsel %vm363, %v333, 0
  %v386 = vsel %vm363, %v334, 0
  %v389 = vsel %vm363, %v335, 0
  %v392 = vsel %vm363, %v336, 0
  %v395 = vsel %vm363, %v337, 0
  %v398 = vsel %vm363, %v338, 0
  %v401 = vsel %vm363, %v339, 0
  %v404 = vsel %vm363, %v340, 0
  %v407 = vsel %vm363, %v341, 0
  %v410 = vsel %vm363, %v342, 0
  %v413 = vsel %vm363, %v343, 0
  %v416 = vsel %vm363, %v344, 0
  %v419 = vsel %vm363, %v345, 0
  %v422 = vsel %vm363, %v346, 0
  %v425 = vsel %vm363, %v347, 0
  %v428 = vsel %vm363, %v348, 0
  %v431 = vsel %vm363, %v349, 0
  %v434 = vsel %vm363, %v350, 0
  %v437 = vsel %vm363, %v351, 0
  %439 = vmatprep.subr.mxu0 0.0
  %440 = vmatpush1.msra.mxu0 %v352
  %441 = vmatprep.subr.mxu0 0.0
  %442 = vmatpush1.msra.mxu0 %v353
  %443 = vmatprep.subr.mxu0 0.0
  %444 = vmatpush1.msra.mxu0 %v354
  %445 = vmatprep.subr.mxu0 0.0
  %446 = vmatpush1.msra.mxu0 %v355
  %447 = vmatprep.subr.mxu0 0.0
  %448 = vmatpush1.msra.mxu0 0.0
  %449 = vmatprep.subr.mxu0 0.0
  %450 = vmatpush1.msra.mxu0 0.0
  %451 = vmatprep.subr.mxu0 0.0
  %452 = vmatpush1.msra.mxu0 0.0
  %453 = vmatprep.subr.mxu0 0.0
  %454 = vmatpush1.msra.mxu0 0.0
  %455 = vmatprep.subr.mxu0 0.0
  %456 = vmatpush1.msra.mxu0 0.0
  %457 = vmatprep.subr.mxu0 0.0
  %458 = vmatpush1.msra.mxu0 0.0
  %459 = vmatprep.subr.mxu0 0.0
  %460 = vmatpush1.msra.mxu0 0.0
  %461 = vmatprep.subr.mxu0 0.0
  %462 = vmatpush1.msra.mxu0 0.0
  %463 = vmatprep.subr.mxu0 0.0
  %464 = vmatpush1.msra.mxu0 0.0
  %465 = vmatprep.subr.mxu0 0.0
  %466 = vmatpush1.msra.mxu0 0.0
  %467 = vmatprep.subr.mxu0 0.0
  %468 = vmatpush1.msra.mxu0 0.0
  %469 = vmatprep.subr.mxu0 0.0
  %470 = vmatpush1.msra.mxu0 0.0
  %471 = vmatprep.subr.mxu0 0.0
  %472 = vmatpush1.msra.mxu0 0.0
  %473 = vmatprep.subr.mxu0 0.0
  %474 = vmatpush1.msra.mxu0 0.0
  %475 = vmatprep.subr.mxu0 0.0
  %476 = vmatpush1.msra.mxu0 0.0
  %477 = vmatprep.subr.mxu0 0.0
  %478 = vmatpush1.msra.mxu0 0.0
  %479 = vmatprep.subr.mxu0 0.0
  %480 = vmatpush1.msra.mxu0 0.0
  %481 = vmatprep.subr.mxu0 0.0
  %482 = vmatpush1.msra.mxu0 0.0
  %483 = vmatprep.subr.mxu0 0.0
  %484 = vmatpush1.msra.mxu0 0.0
  %485 = vmatprep.subr.mxu0 0.0
  %486 = vmatpush1.msra.mxu0 0.0
  %487 = vmatprep.subr.mxu0 0.0
  %488 = vmatpush1.msra.mxu0 0.0
  %489 = vmatprep.subr.mxu0 0.0
  %490 = vmatpush1.msra.mxu0 0.0
  %491 = vmatprep.subr.mxu0 0.0
  %492 = vmatpush1.msra.mxu0 0.0
  %493 = vmatprep.subr.mxu0 0.0
  %494 = vmatpush1.msra.mxu0 0.0
  %495 = vmatprep.subr.mxu0 0.0
  %496 = vmatpush1.msra.mxu0 0.0
  %497 = vmatprep.subr.mxu0 0.0
  %498 = vmatpush1.msra.mxu0 0.0
  %499 = vmatprep.subr.mxu0 0.0
  %500 = vmatpush1.msra.mxu0 0.0
  %501 = vmatprep.subr.mxu0 0.0
  %502 = vmatpush1.msra.mxu0 0.0
  %503 = vmatprep.mubr.f32.mxu0 0.0
  %504 = vmatmul.mubr.f32.gmra.mrb[0].mxu0 %v365
  %v505 = vpop.f32.mrb[0].mxu0
  %v506 = vadd.f32 %v361, %v505
  %v507 = vpop.f32.mrb[0].mxu0
  %508 = vmatprep.mubr.f32.mxu0 0.0
  %509 = vmatmul.mubr.f32.gmra.mrb[0].mxu0 %v368
  %v510 = vpop.f32.mrb[0].mxu0
  %v511 = vadd.f32 %v361, %v510
  %v512 = vpop.f32.mrb[0].mxu0
  %513 = vmatprep.mubr.f32.mxu0 0.0
  %514 = vmatmul.mubr.f32.gmra.mrb[0].mxu0 %v371
  %v515 = vpop.f32.mrb[0].mxu0
  %v516 = vadd.f32 %v361, %v515
  %v517 = vpop.f32.mrb[0].mxu0
  %518 = vmatprep.mubr.f32.mxu0 0.0
  %519 = vmatmul.mubr.f32.gmra.mrb[0].mxu0 %v374
  %v520 = vpop.f32.mrb[0].mxu0
  %v521 = vadd.f32 %v361, %v520
  %v522 = vpop.f32.mrb[0].mxu0
  %523 = vmatprep.mubr.f32.mxu0 0.0
  %524 = vmatmul.mubr.f32.gmra.mrb[0].mxu0 %v377
  %v525 = vpop.f32.mrb[0].mxu0
  %v526 = vadd.f32 %v361, %v525
  %v527 = vpop.f32.mrb[0].mxu0
  %528 = vmatprep.mubr.f32.mxu0 0.0
  %529 = vmatmul.mubr.f32.gmra.mrb[0].mxu0 %v380
  %v530 = vpop.f32.mrb[0].mxu0
  %v531 = vadd.f32 %v361, %v530
  %v532 = vpop.f32.mrb[0].mxu0
  %533 = vmatprep.mubr.f32.mxu0 0.0
  %534 = vmatmul.mubr.f32.gmra.mrb[0].mxu0 %v383
  %v535 = vpop.f32.mrb[0].mxu0
  %v536 = vadd.f32 %v361, %v535
  %v537 = vpop.f32.mrb[0].mxu0
  %538 = vmatprep.mubr.f32.mxu0 0.0
  %539 = vmatmul.mubr.f32.gmra.mrb[0].mxu0 %v386
  %v540 = vpop.f32.mrb[0].mxu0
  %v541 = vadd.f32 %v361, %v540
  %v542 = vpop.f32.mrb[0].mxu0
  %543 = vmatprep.mubr.f32.mxu0 0.0
  %544 = vmatmul.mubr.f32.gmra.mrb[0].mxu0 %v389
  %v545 = vpop.f32.mrb[0].mxu0
  %v546 = vadd.f32 %v361, %v545
  %v547 = vpop.f32.mrb[0].mxu0
  %548 = vmatprep.mubr.f32.mxu0 0.0
  %549 = vmatmul.mubr.f32.gmra.mrb[0].mxu0 %v392
  %v550 = vpop.f32.mrb[0].mxu0
  %v551 = vadd.f32 %v361, %v550
  %v552 = vpop.f32.mrb[0].mxu0
  %553 = vmatprep.mubr.f32.mxu0 0.0
  %554 = vmatmul.mubr.f32.gmra.mrb[0].mxu0 %v395
  %v555 = vpop.f32.mrb[0].mxu0
  %v556 = vadd.f32 %v361, %v555
  %v557 = vpop.f32.mrb[0].mxu0
  %558 = vmatprep.mubr.f32.mxu0 0.0
  %559 = vmatmul.mubr.f32.gmra.mrb[0].mxu0 %v398
  %v560 = vpop.f32.mrb[0].mxu0
  %v561 = vadd.f32 %v361, %v560
  %v562 = vpop.f32.mrb[0].mxu0
  %563 = vmatprep.mubr.f32.mxu0 0.0
  %564 = vmatmul.mubr.f32.gmra.mrb[0].mxu0 %v401
  %v565 = vpop.f32.mrb[0].mxu0
  %v566 = vadd.f32 %v361, %v565
  %v567 = vpop.f32.mrb[0].mxu0
  %568 = vmatprep.mubr.f32.mxu0 0.0
  %569 = vmatmul.mubr.f32.gmra.mrb[0].mxu0 %v404
  %v570 = vpop.f32.mrb[0].mxu0
  %v571 = vadd.f32 %v361, %v570
  %v572 = vpop.f32.mrb[0].mxu0
  %573 = vmatprep.mubr.f32.mxu0 0.0
  %574 = vmatmul.mubr.f32.gmra.mrb[0].mxu0 %v407
  %v575 = vpop.f32.mrb[0].mxu0
  %v576 = vadd.f32 %v361, %v575
  %v577 = vpop.f32.mrb[0].mxu0
  %578 = vmatprep.mubr.f32.mxu0 0.0
  %579 = vmatmul.mubr.f32.gmra.mrb[0].mxu0 %v410
  %v580 = vpop.f32.mrb[0].mxu0
  %v581 = vadd.f32 %v361, %v580
  %v582 = vpop.f32.mrb[0].mxu0
  %583 = vmatprep.mubr.f32.mxu0 0.0
  %584 = vmatmul.mubr.f32.gmra.mrb[0].mxu0 %v413
  %v585 = vpop.f32.mrb[0].mxu0
  %v586 = vadd.f32 %v361, %v585
  %v587 = vpop.f32.mrb[0].mxu0
  %588 = vmatprep.mubr.f32.mxu0 0.0
  %589 = vmatmul.mubr.f32.gmra.mrb[0].mxu0 %v416
  %v590 = vpop.f32.mrb[0].mxu0
  %v591 = vadd.f32 %v361, %v590
  %v592 = vpop.f32.mrb[0].mxu0
  %593 = vmatprep.mubr.f32.mxu0 0.0
  %594 = vmatmul.mubr.f32.gmra.mrb[0].mxu0 %v419
  %v595 = vpop.f32.mrb[0].mxu0
  %v596 = vadd.f32 %v361, %v595
  %v597 = vpop.f32.mrb[0].mxu0
  %598 = vmatprep.mubr.f32.mxu0 0.0
  %599 = vmatmul.mubr.f32.gmra.mrb[0].mxu0 %v422
  %v600 = vpop.f32.mrb[0].mxu0
  %v601 = vadd.f32 %v361, %v600
  %v602 = vpop.f32.mrb[0].mxu0
  %603 = vmatprep.mubr.f32.mxu0 0.0
  %604 = vmatmul.mubr.f32.gmra.mrb[0].mxu0 %v425
  %v605 = vpop.f32.mrb[0].mxu0
  %v606 = vadd.f32 %v361, %v605
  %v607 = vpop.f32.mrb[0].mxu0
  %608 = vmatprep.mubr.f32.mxu0 0.0
  %609 = vmatmul.mubr.f32.gmra.mrb[0].mxu0 %v428
  %v610 = vpop.f32.mrb[0].mxu0
  %v611 = vadd.f32 %v361, %v610
  %v612 = vpop.f32.mrb[0].mxu0
  %613 = vmatprep.mubr.f32.mxu0 0.0
  %614 = vmatmul.mubr.f32.gmra.mrb[0].mxu0 %v431
  %v615 = vpop.f32.mrb[0].mxu0
  %v616 = vadd.f32 %v361, %v615
  %v617 = vpop.f32.mrb[0].mxu0
  %618 = vmatprep.mubr.f32.mxu0 0.0
  %619 = vmatmul.mubr.f32.gmra.mrb[0].mxu0 %v434
  %v620 = vpop.f32.mrb[0].mxu0
  %v621 = vadd.f32 %v361, %v620
  %v622 = vpop.f32.mrb[0].mxu0
  %623 = vmatprep.mubr.f32.mxu0 0.0
  %624 = vmatmul.mubr.f32.gmra.mrb[0].mxu0 %v437
  %v625 = vpop.f32.mrb[0].mxu0
  %v626 = vadd.f32 %v361, %v625
  %v627 = vpop.f32.mrb[0].mxu0
  %628 = vdwg.mxu0
  %v629 = vmax.f32 %v506, 0.0
  %v630 = vmax.f32 %v511, 0.0
  %v631 = vmax.f32 %v516, 0.0
  %v632 = vmax.f32 %v521, 0.0
  %v633 = vmax.f32 %v526, 0.0
  %v634 = vmax.f32 %v531, 0.0
  %v635 = vmax.f32 %v536, 0.0
  %v636 = vmax.f32 %v541, 0.0
  %v637 = vmax.f32 %v546, 0.0
  %v638 = vmax.f32 %v551, 0.0
  %v639 = vmax.f32 %v556, 0.0
  %v640 = vmax.f32 %v561, 0.0
  %v641 = vmax.f32 %v566, 0.0
  %v642 = vmax.f32 %v571, 0.0
  %v643 = vmax.f32 %v576, 0.0
  %v644 = vmax.f32 %v581, 0.0
  %v645 = vmax.f32 %v586, 0.0
  %v646 = vmax.f32 %v591, 0.0
  %v647 = vmax.f32 %v596, 0.0
  %v648 = vmax.f32 %v601, 0.0
  %v649 = vmax.f32 %v606, 0.0
  %v650 = vmax.f32 %v611, 0.0
  %v651 = vmax.f32 %v616, 0.0
  %v652 = vmax.f32 %v621, 0.0
  %v653 = vmax.f32 %v626, 0.0
  %v654 = vld [vmem:[%s5] sm:$0x1]
  %v656 = vlaneseq
  %v657 = vshrl.u32 %v656, 7
  %v658 = vsub.s32 0, %v657
  %v659 = vrot.slane %v654, %v658
  %v661 = vmul.f32 %v629, %v659
  %v662 = vmul.f32 %v630, %v659
  %v663 = vmul.f32 %v631, %v659
  %v664 = vmul.f32 %v632, %v659
  %v665 = vmul.f32 %v633, %v659
  %v666 = vmul.f32 %v634, %v659
  %v667 = vmul.f32 %v635, %v659
  %v668 = vmul.f32 %v636, %v659
  %v669 = vmul.f32 %v637, %v659
  %v670 = vmul.f32 %v638, %v659
  %v671 = vmul.f32 %v639, %v659
  %v672 = vmul.f32 %v640, %v659
  %v673 = vmul.f32 %v641, %v659
  %v674 = vmul.f32 %v642, %v659
  %v675 = vmul.f32 %v643, %v659
  %v676 = vmul.f32 %v644, %v659
  %v677 = vmul.f32 %v645, %v659
  %v678 = vmul.f32 %v646, %v659
  %v679 = vmul.f32 %v647, %v659
  %v680 = vmul.f32 %v648, %v659
  %v681 = vmul.f32 %v649, %v659
  %v682 = vmul.f32 %v650, %v659
  %v683 = vmul.f32 %v651, %v659
  %v684 = vmul.f32 %v652, %v659
  %v685 = vmul.f32 %v653, %v659
  %v686 = vsel %vm363, %v661, 0.0
  %687 = vadd.xlane.f32.xlu0 %v686
  %v688 = vpop.xlane.xlu0 %687
  %v689 = vsel %vm363, %v662, 0.0
  %690 = vadd.xlane.f32.xlu0 %v689
  %v691 = vpop.xlane.xlu0 %690
  %v692 = vsel %vm363, %v663, 0.0
  %693 = vadd.xlane.f32.xlu0 %v692
  %v694 = vpop.xlane.xlu0 %693
  %v695 = vsel %vm363, %v664, 0.0
  %696 = vadd.xlane.f32.xlu0 %v695
  %v697 = vpop.xlane.xlu0 %696
  %v698 = vsel %vm363, %v665, 0.0
  %699 = vadd.xlane.f32.xlu0 %v698
  %v700 = vpop.xlane.xlu0 %699
  %v701 = vsel %vm363, %v666, 0.0
  %702 = vadd.xlane.f32.xlu0 %v701
  %v703 = vpop.xlane.xlu0 %702
  %v704 = vsel %vm363, %v667, 0.0
  %705 = vadd.xlane.f32.xlu0 %v704
  %v706 = vpop.xlane.xlu0 %705
  %v707 = vsel %vm363, %v668, 0.0
  %708 = vadd.xlane.f32.xlu0 %v707
  %v709 = vpop.xlane.xlu0 %708
  %v710 = vsel %vm363, %v669, 0.0
  %711 = vadd.xlane.f32.xlu0 %v710
  %v712 = vpop.xlane.xlu0 %711
  %v713 = vsel %vm363, %v670, 0.0
  %714 = vadd.xlane.f32.xlu0 %v713
  %v715 = vpop.xlane.xlu0 %714
  %v716 = vsel %vm363, %v671, 0.0
  %717 = vadd.xlane.f32.xlu0 %v716
  %v718 = vpop.xlane.xlu0 %717
  %v719 = vsel %vm363, %v672, 0.0
  %720 = vadd.xlane.f32.xlu0 %v719
  %v721 = vpop.xlane.xlu0 %720
  %v722 = vsel %vm363, %v673, 0.0
  %723 = vadd.xlane.f32.xlu0 %v722
  %v724 = vpop.xlane.xlu0 %723
  %v725 = vsel %vm363, %v674, 0.0
  %726 = vadd.xlane.f32.xlu0 %v725
  %v727 = vpop.xlane.xlu0 %726
  %v728 = vsel %vm363, %v675, 0.0
  %729 = vadd.xlane.f32.xlu0 %v728
  %v730 = vpop.xlane.xlu0 %729
  %v731 = vsel %vm363, %v676, 0.0
  %732 = vadd.xlane.f32.xlu0 %v731
  %v733 = vpop.xlane.xlu0 %732
  %v734 = vsel %vm363, %v677, 0.0
  %735 = vadd.xlane.f32.xlu0 %v734
  %v736 = vpop.xlane.xlu0 %735
  %v737 = vsel %vm363, %v678, 0.0
  %738 = vadd.xlane.f32.xlu0 %v737
  %v739 = vpop.xlane.xlu0 %738
  %v740 = vsel %vm363, %v679, 0.0
  %741 = vadd.xlane.f32.xlu0 %v740
  %v742 = vpop.xlane.xlu0 %741
  %v743 = vsel %vm363, %v680, 0.0
  %744 = vadd.xlane.f32.xlu0 %v743
  %v745 = vpop.xlane.xlu0 %744
  %v746 = vsel %vm363, %v681, 0.0
  %747 = vadd.xlane.f32.xlu0 %v746
  %v748 = vpop.xlane.xlu0 %747
  %v749 = vsel %vm363, %v682, 0.0
  %750 = vadd.xlane.f32.xlu0 %v749
  %v751 = vpop.xlane.xlu0 %750
  %v752 = vsel %vm363, %v683, 0.0
  %753 = vadd.xlane.f32.xlu0 %v752
  %v754 = vpop.xlane.xlu0 %753
  %v755 = vsel %vm363, %v684, 0.0
  %756 = vadd.xlane.f32.xlu0 %v755
  %v757 = vpop.xlane.xlu0 %756
  %v758 = vsel %vm363, %v685, 0.0
  %759 = vadd.xlane.f32.xlu0 %v758
  %v760 = vpop.xlane.xlu0 %759
  %s761 = sld [smem:[#allocation2]]
  %v762 = vstv %s761
  %v763 = vadd.f32 %v688, %v762
  %v764 = vadd.f32 %v691, %v762
  %v765 = vadd.f32 %v694, %v762
  %v766 = vadd.f32 %v697, %v762
  %v767 = vadd.f32 %v700, %v762
  %v768 = vadd.f32 %v703, %v762
  %v769 = vadd.f32 %v706, %v762
  %v770 = vadd.f32 %v709, %v762
  %v771 = vadd.f32 %v712, %v762
  %v772 = vadd.f32 %v715, %v762
  %v773 = vadd.f32 %v718, %v762
  %v774 = vadd.f32 %v721, %v762
  %v775 = vadd.f32 %v724, %v762
  %v776 = vadd.f32 %v727, %v762
  %v777 = vadd.f32 %v730, %v762
  %v778 = vadd.f32 %v733, %v762
  %v779 = vadd.f32 %v736, %v762
  %v780 = vadd.f32 %v739, %v762
  %v781 = vadd.f32 %v742, %v762
  %v782 = vadd.f32 %v745, %v762
  %v783 = vadd.f32 %v748, %v762
  %v784 = vadd.f32 %v751, %v762
  %v785 = vadd.f32 %v754, %v762
  %v786 = vadd.f32 %v757, %v762
  %v787 = vadd.f32 %v760, %v762
  %vm788 = vcmask 7168
  %789 = vst.msk [vmem:[%s7] sm:$0xff] %vm788, %v763
  %790 = vst.msk [vmem:[%s7 + $0x8] sm:$0xff] %vm788, %v764
  %791 = vst.msk [vmem:[%s7 + $0x10] sm:$0xff] %vm788, %v765
  %792 = vst.msk [vmem:[%s7 + $0x18] sm:$0xff] %vm788, %v766
  %793 = vst.msk [vmem:[%s7 + $0x20] sm:$0xff] %vm788, %v767
  %794 = vst.msk [vmem:[%s7 + $0x28] sm:$0xff] %vm788, %v768
  %795 = vst.msk [vmem:[%s7 + $0x30] sm:$0xff] %vm788, %v769
  %796 = vst.msk [vmem:[%s7 + $0x38] sm:$0xff] %vm788, %v770
  %797 = vst.msk [vmem:[%s7 + $0x40] sm:$0xff] %vm788, %v771
  %798 = vst.msk [vmem:[%s7 + $0x48] sm:$0xff] %vm788, %v772
  %799 = vst.msk [vmem:[%s7 + $0x50] sm:$0xff] %vm788, %v773
  %800 = vst.msk [vmem:[%s7 + $0x58] sm:$0xff] %vm788, %v774
  %801 = vst.msk [vmem:[%s7 + $0x60] sm:$0xff] %vm788, %v775
  %802 = vst.msk [vmem:[%s7 + $0x68] sm:$0xff] %vm788, %v776
  %803 = vst.msk [vmem:[%s7 + $0x70] sm:$0xff] %vm788, %v777
  %804 = vst.msk [vmem:[%s7 + $0x78] sm:$0xff] %vm788, %v778
  %805 = vst.msk [vmem:[%s7 + $0x80] sm:$0xff] %vm788, %v779
  %806 = vst.msk [vmem:[%s7 + $0x88] sm:$0xff] %vm788, %v780
  %807 = vst.msk [vmem:[%s7 + $0x90] sm:$0xff] %vm788, %v781
  %808 = vst.msk [vmem:[%s7 + $0x98] sm:$0xff] %vm788, %v782
  %809 = vst.msk [vmem:[%s7 + $0xa0] sm:$0xff] %vm788, %v783
  %810 = vst.msk [vmem:[%s7 + $0xa8] sm:$0xff] %vm788, %v784
  %811 = vst.msk [vmem:[%s7 + $0xb0] sm:$0xff] %vm788, %v785
  %812 = vst.msk [vmem:[%s7 + $0xb8] sm:$0xff] %vm788, %v786
  %813 = vst.msk [vmem:[%s7 + $0xc0] sm:$0xff] %vm788, %v787
  // Predicated region
  $region30: #{regression_forward.1} parent=0 // pred_check
    _
  $region31: #{regression_forward.1} parent=0 // pred_check_branch
    %815 = sbr.rel (0) target = $region33
  $region32: #{regression_forward.1} parent=0 // pred_region
    _
  $region33: #{regression_forward.1} parent=0 // pred_fallthru
    _
  // Predicated region
  $region34: #{regression_forward.1} parent=0 // pred_check
    _
  $region35: #{regression_forward.1} parent=0 // pred_check_branch
    %817 = sbr.rel (0) target = $region37
  $region36: #{regression_forward.1} parent=0 // pred_region
    _
  $region37: #{regression_forward.1} parent=0 // pred_fallthru
    _

</llo_original>
